<compile_context>
chip_gen: v5e
topology: v5e:2x2
jax: 0.10.0
libtpu: 0.0.40
codegen_flags: <defaults>
</compile_context>

<pallas_src>
import functools

import jax
import jax.numpy as jnp
from jax.experimental import pallas as pl
from jax.experimental.pallas import tpu as pltpu


def _classifier_kernel(x_ref, w1_ref, b1_ref, w2_ref, b2_ref, w3_ref, b3_ref,
                       o_ref, acc_ref, *, inv_t):
    t = pl.program_id(1)

    @pl.when(t == 0)
    def _init():
        acc_ref[...] = jnp.zeros_like(acc_ref)

    # Partial sum over this T tile (AdaptiveAvgPool1d(1) == mean over T; zero-padded
    # rows contribute nothing; scale by 1/T_true at finalize).
    # NOTE: if bundle dumps ever show vreg spills for multi-MiB tiles, split this into
    # a lax.fori_loop over ~256-row sub-chunks; not needed while the kernel is DMA-bound.
    acc_ref[...] += jnp.sum(x_ref[...].astype(jnp.float32), axis=1)

    @pl.when(t == pl.num_programs(1) - 1)
    def _finalize():
        pooled = acc_ref[...] * inv_t  # (bB, F)

        # fc1 + ReLU (dropout is identity in eval mode)
        h1 = jnp.dot(pooled, w1_ref[...], preferred_element_type=jnp.float32) + b1_ref[...]
        h1 = jnp.maximum(h1, 0.0)
        # fc2 + ReLU
        h2 = jnp.dot(h1, w2_ref[...], preferred_element_type=jnp.float32) + b2_ref[...]
        h2 = jnp.maximum(h2, 0.0)
        # fc3
        out = jnp.dot(h2, w3_ref[...], preferred_element_type=jnp.float32) + b3_ref[...]
        o_ref[...] = out.astype(o_ref.dtype)


def _round_up(n, m):
    return ((n + m - 1) // m) * m


def _choose_batch_tile(B):
    """Pick (bB, padded B) so the 'parallel' axis has >= 2 tiles when B >= 16 (v7x
    megacore) while minimizing padded (wasted) rows; bB is a multiple of 8, <= 512."""
    if B < 16:
        bB = _round_up(B, 8)
        return bB, bB
    best = None
    hi = min(512, _round_up((B + 1) // 2, 8))
    for bB in range(8, hi + 8, 8):
        nB = -(-B // bB)
        if nB < 2:
            continue
        pad = nB * bB - B
        key = (pad, -bB)  # least padding, then fewest grid steps
        if best is None or key < best[0]:
            best = (key, bB, nB)
    _, bB, nB = best
    return bB, nB * bB


def classifier_forward(x, w1, b1, w2, b2, w3, b3):
    B, T, F = x.shape
    h1n = w1.shape[1]
    h2n = w2.shape[1]
    classnum = w3.shape[1]
    itemsize = jnp.dtype(x.dtype).itemsize

    # Generation-aware VMEM budget.
    try:
        vmem_cap = pltpu.get_tpu_info().vmem_capacity_bytes
    except Exception:
        vmem_cap = 64 << 20  # conservative default
    if vmem_cap <= (64 << 20):            # v7x-class (64 MiB VMEM per core)
        tile_target, vmem_cap_limit = 8 << 20, 48 << 20
    else:                                 # v5e / v6e (128 MiB VMEM)
        tile_target, vmem_cap_limit = 16 << 20, 96 << 20

    bB, Bp = _choose_batch_tile(B)

    # Sequence tile: one streamed x buffer <= tile_target (double-buffered by Pallas).
    max_bt = max(8, ((tile_target // max(1, bB * F * itemsize)) // 8) * 8)
    bT = min(_round_up(T, 8), max_bt)
    nT = -(-T // bT)
    Tp = nT * bT

    # Zero-pad B/T up to the tile grid (never fall back to a full-extent block).
    if (Bp, Tp) != (B, T):
        x = jnp.pad(x, ((0, Bp - B), (0, Tp - T), (0, 0)))

    grid = (Bp // bB, Tp // bT)

    # Advisory cost estimate: tiny FLOPs, HBM-bandwidth-bound on x.
    flops = 2 * B * (F * h1n + h1n * h2n + h2n * classnum) + Bp * Tp * F
    w_bytes = sum(a.size * jnp.dtype(a.dtype).itemsize for a in (w1, b1, w2, b2, w3, b3))
    bytes_accessed = Bp * Tp * F * itemsize + w_bytes + Bp * classnum * 4
    cost = pl.CostEstimate(flops=flops, transcendentals=0, bytes_accessed=bytes_accessed)

    vmem_need = (2 * bB * bT * F * itemsize + 2 * w_bytes
                 + bB * F * 4 + 2 * bB * classnum * 4)
    vmem_limit = min(max(int(vmem_need * 2) + (1 << 20), 16 << 20), vmem_cap_limit)

    kernel = functools.partial(_classifier_kernel, inv_t=1.0 / float(T))

    def _run(single_buffer_weights):
        def wspec(shape):
            idx = lambda b, t: (0, 0)
            if single_buffer_weights:
                # Constant index map -> never refetched; one buffer saves VMEM headroom.
                return pl.BlockSpec(shape, idx, pipeline_mode=pl.Buffered(1))
            return pl.BlockSpec(shape, idx)

        out = pl.pallas_call(
            kernel,
            out_shape=jax.ShapeDtypeStruct((Bp, classnum), jnp.float32),
            grid_spec=pltpu.PrefetchScalarGridSpec(
                num_scalar_prefetch=0,
                grid=grid,
                in_specs=[
                    pl.BlockSpec((bB, bT, F), lambda b, t: (b, t, 0)),
                    wspec(w1.shape), wspec(b1.shape),
                    wspec(w2.shape), wspec(b2.shape),
                    wspec(w3.shape), wspec(b3.shape),
                ],
                out_specs=pl.BlockSpec((bB, classnum), lambda b, t: (b, 0)),
                scratch_shapes=[pltpu.VMEM((bB, F), jnp.float32)],
            ),
            compiler_params=pltpu.CompilerParams(
                dimension_semantics=("parallel", "arbitrary"),
                vmem_limit_bytes=vmem_limit,
            ),
            cost_estimate=cost,
        )(x, w1, b1, w2, b2, w3, b3)
        return jax.block_until_ready(out)

    try:
        out = _run(True)
    except Exception:
        # Fallback if this Pallas build rejects single-buffered (Buffered(1)) operands.
        out = _run(False)

    return out[:B]


def init_params(key, feadim, classnum):
    h1 = feadim // 2
    h2 = feadim // 4
    ks = jax.random.split(key, 6)

    # Deterministic synthetic init (uniform, roughly PyTorch Linear scale).
    def u(k, shape, fan_in):
        bound = 1.0 / jnp.sqrt(fan_in)
        return jax.random.uniform(k, shape, jnp.float32, -bound, bound)

    w1 = u(ks[0], (feadim, h1), feadim)    # stored [in, out] (transposed vs PyTorch)
    b1 = u(ks[1], (1, h1), feadim)         # (1, h): cheap sublane-broadcast read
    w2 = u(ks[2], (h1, h2), h1)
    b2 = u(ks[3], (1, h2), h1)
    w3 = u(ks[4], (h2, classnum), h2)
    b3 = u(ks[5], (1, classnum), h2)
    return w1, b1, w2, b2, w3, b3


def reference_forward(x, w1, b1, w2, b2, w3, b3):
    pooled = jnp.mean(x, axis=1)
    a1 = jnp.maximum(pooled @ w1 + b1, 0.0)
    a2 = jnp.maximum(a1 @ w2 + b2, 0.0)
    return a2 @ w3 + b3


if __name__ == "__main__":
    key = jax.random.PRNGKey(0)
    B, T, feadim, classnum = 8, 16, 128, 8

    kx, kp = jax.random.split(key)
    # Stream activations in bf16 (halves HBM traffic); the kernel accumulates in f32,
    # so numerics match an f32 reference on the same bf16-rounded values.
    x = jax.random.normal(kx, (B, T, feadim), jnp.float32).astype(jnp.bfloat16)
    params = init_params(kp, feadim, classnum)

    out = classifier_forward(x, *params)
    out = jax.block_until_ready(out)

    ref = reference_forward(x.astype(jnp.float32), *params)
    assert out.shape == (B, classnum)
    assert jnp.allclose(out, ref, atol=2e-3, rtol=2e-3), "mismatch vs reference"

    print("KERNEL_OK")
</pallas_src>

<mosaic_0001>
module attributes {stable_mosaic.version = 11 : i64} {
  func.func @_classifier_kernel(%arg0: i32, %arg1: i32, %arg2: memref<8x16x128xbf16, #tpu.memory_space<vmem>>, %arg3: memref<128x64xf32, #tpu.memory_space<vmem>>, %arg4: memref<1x64xf32, #tpu.memory_space<vmem>>, %arg5: memref<64x32xf32, #tpu.memory_space<vmem>>, %arg6: memref<1x32xf32, #tpu.memory_space<vmem>>, %arg7: memref<32x8xf32, #tpu.memory_space<vmem>>, %arg8: memref<1x8xf32, #tpu.memory_space<vmem>>, %arg9: memref<8x8xf32, #tpu.memory_space<vmem>>, %arg10: memref<8x128xf32, #tpu.memory_space<vmem>>) attributes {dimension_semantics = [#tpu.dimension_semantics<parallel>, #tpu.dimension_semantics<arbitrary>], iteration_bounds = array<i64: 1, 1>, scalar_prefetch = 0 : i64, scratch_operands = 1 : i64, tpu.core_type = #tpu.core_type<tc>, window_params = [{transform_indices = @transform_0, window_bounds = array<i64: 8, 16, 128>}, {pipeline_mode = #tpu.pipeline_mode<synchronous>, transform_indices = @transform_1, window_bounds = array<i64: 128, 64>}, {pipeline_mode = #tpu.pipeline_mode<synchronous>, transform_indices = @transform_2, window_bounds = array<i64: 1, 64>}, {pipeline_mode = #tpu.pipeline_mode<synchronous>, transform_indices = @transform_3, window_bounds = array<i64: 64, 32>}, {pipeline_mode = #tpu.pipeline_mode<synchronous>, transform_indices = @transform_4, window_bounds = array<i64: 1, 32>}, {pipeline_mode = #tpu.pipeline_mode<synchronous>, transform_indices = @transform_5, window_bounds = array<i64: 32, 8>}, {pipeline_mode = #tpu.pipeline_mode<synchronous>, transform_indices = @transform_6, window_bounds = array<i64: 1, 8>}, {transform_indices = @transform_7, window_bounds = array<i64: 8, 8>}]} {
    %c0_i32 = arith.constant 0 : i32
    %0 = arith.cmpi eq, %arg1, %c0_i32 : i32
    %1 = arith.extui %0 : i1 to i32
    %c0_i32_0 = arith.constant 0 : i32
    %2 = arith.cmpi ne, %1, %c0_i32_0 : i32
    scf.if %2 {
      %cst_9 = arith.constant 0.000000e+00 : f32
      %12 = vector.broadcast %cst_9 : f32 to vector<8x128xf32>
      %c0_10 = arith.constant 0 : index
      %c0_11 = arith.constant 0 : index
      %13 = vector.load %arg10[%c0_10, %c0_11] : memref<8x128xf32, #tpu.memory_space<vmem>>, vector<8x128xf32>
      tpu.vector_store %arg10[%c0_10, %c0_11], %12 {strides = array<i32>} : memref<8x128xf32, #tpu.memory_space<vmem>>, vector<8x128xf32>,
    } else {
    }
    %c0 = arith.constant 0 : index
    %c0_1 = arith.constant 0 : index
    %3 = vector.load %arg10[%c0, %c0_1] : memref<8x128xf32, #tpu.memory_space<vmem>>, vector<8x128xf32>
    %c0_2 = arith.constant 0 : index
    %c0_3 = arith.constant 0 : index
    %c0_4 = arith.constant 0 : index
    %4 = vector.load %arg2[%c0_2, %c0_3, %c0_4] : memref<8x16x128xbf16, #tpu.memory_space<vmem>>, vector<8x16x128xbf16>
    %5 = arith.extf %4 : vector<8x16x128xbf16> to vector<8x16x128xf32>
    %cst = arith.constant dense<0.000000e+00> : vector<8x128xf32>
    %6 = vector.multi_reduction <add>, %5, %cst [1] : vector<8x16x128xf32> to vector<8x128xf32>
    %7 = arith.addf %3, %6 : vector<8x128xf32>
    %c0_5 = arith.constant 0 : index
    %c0_6 = arith.constant 0 : index
    %8 = vector.load %arg10[%c0_5, %c0_6] : memref<8x128xf32, #tpu.memory_space<vmem>>, vector<8x128xf32>
    tpu.vector_store %arg10[%c0_5, %c0_6], %7 {strides = array<i32>} : memref<8x128xf32, #tpu.memory_space<vmem>>, vector<8x128xf32>,
    %c0_i32_7 = arith.constant 0 : i32
    %9 = arith.cmpi eq, %arg1, %c0_i32_7 : i32
    %10 = arith.extui %9 : i1 to i32
    %c0_i32_8 = arith.constant 0 : i32
    %11 = arith.cmpi ne, %10, %c0_i32_8 : i32
    scf.if %11 {
      %c0_9 = arith.constant 0 : index
      %c0_10 = arith.constant 0 : index
      %12 = vector.load %arg10[%c0_9, %c0_10] : memref<8x128xf32, #tpu.memory_space<vmem>>, vector<8x128xf32>
      %cst_11 = arith.constant 6.250000e-02 : f32
      %13 = vector.broadcast %cst_11 : f32 to vector<8x128xf32>
      %14 = arith.mulf %12, %13 : vector<8x128xf32>
      %c0_12 = arith.constant 0 : index
      %c0_13 = arith.constant 0 : index
      %15 = vector.load %arg3[%c0_12, %c0_13] : memref<128x64xf32, #tpu.memory_space<vmem>>, vector<128x64xf32>
      %cst_14 = arith.constant dense<0.000000e+00> : vector<8x64xf32>
      %16 = tpu.matmul %14, %15, %cst_14 {dimension_numbers = #tpu.dot_dimension_numbers<[1], [0], [0], [1], [0, 0, 1, 1], [], []>} : vector<8x128xf32>, vector<128x64xf32>, vector<8x64xf32> -> vector<8x64xf32>
      %c0_15 = arith.constant 0 : index
      %c0_16 = arith.constant 0 : index
      %17 = vector.load %arg4[%c0_15, %c0_16] : memref<1x64xf32, #tpu.memory_space<vmem>>, vector<1x64xf32>
      %18 = vector.broadcast %17 : vector<1x64xf32> to vector<8x64xf32>
      %19 = arith.addf %16, %18 : vector<8x64xf32>
      %cst_17 = arith.constant 0.000000e+00 : f32
      %20 = vector.broadcast %cst_17 : f32 to vector<8x64xf32>
      %21 = arith.maximumf %19, %20 : vector<8x64xf32>
      %c0_18 = arith.constant 0 : index
      %c0_19 = arith.constant 0 : index
      %22 = vector.load %arg5[%c0_18, %c0_19] : memref<64x32xf32, #tpu.memory_space<vmem>>, vector<64x32xf32>
      %cst_20 = arith.constant dense<0.000000e+00> : vector<8x32xf32>
      %23 = tpu.matmul %21, %22, %cst_20 {dimension_numbers = #tpu.dot_dimension_numbers<[1], [0], [0], [1], [0, 0, 1, 1], [], []>} : vector<8x64xf32>, vector<64x32xf32>, vector<8x32xf32> -> vector<8x32xf32>
      %c0_21 = arith.constant 0 : index
      %c0_22 = arith.constant 0 : index
      %24 = vector.load %arg6[%c0_21, %c0_22] : memref<1x32xf32, #tpu.memory_space<vmem>>, vector<1x32xf32>
      %25 = vector.broadcast %24 : vector<1x32xf32> to vector<8x32xf32>
      %26 = arith.addf %23, %25 : vector<8x32xf32>
      %cst_23 = arith.constant 0.000000e+00 : f32
      %27 = vector.broadcast %cst_23 : f32 to vector<8x32xf32>
      %28 = arith.maximumf %26, %27 : vector<8x32xf32>
      %c0_24 = arith.constant 0 : index
      %c0_25 = arith.constant 0 : index
      %29 = vector.load %arg7[%c0_24, %c0_25] : memref<32x8xf32, #tpu.memory_space<vmem>>, vector<32x8xf32>
      %cst_26 = arith.constant dense<0.000000e+00> : vector<8x8xf32>
      %30 = tpu.matmul %28, %29, %cst_26 {dimension_numbers = #tpu.dot_dimension_numbers<[1], [0], [0], [1], [0, 0, 1, 1], [], []>} : vector<8x32xf32>, vector<32x8xf32>, vector<8x8xf32> -> vector<8x8xf32>
      %c0_27 = arith.constant 0 : index
      %c0_28 = arith.constant 0 : index
      %31 = vector.load %arg8[%c0_27, %c0_28] : memref<1x8xf32, #tpu.memory_space<vmem>>, vector<1x8xf32>
      %32 = vector.broadcast %31 : vector<1x8xf32> to vector<8x8xf32>
      %33 = arith.addf %30, %32 : vector<8x8xf32>
      %c0_29 = arith.constant 0 : index
      %c0_30 = arith.constant 0 : index
      %34 = vector.load %arg9[%c0_29, %c0_30] : memref<8x8xf32, #tpu.memory_space<vmem>>, vector<8x8xf32>
      tpu.vector_store %arg9[%c0_29, %c0_30], %33 {strides = array<i32>} : memref<8x8xf32, #tpu.memory_space<vmem>>, vector<8x8xf32>,
    } else {
    }
    return
  }
  func.func @transform_0(%arg0: i32, %arg1: i32) -> (i32, i32, i32) {
    %c0_i32 = arith.constant 0 : i32
    %c0_i32_0 = arith.constant 0 : i32
    return %arg0, %arg1, %c0_i32 : i32, i32, i32
  }
  func.func @transform_1(%arg0: i32, %arg1: i32) -> (i32, i32) {
    %c0_i32 = arith.constant 0 : i32
    %c0_i32_0 = arith.constant 0 : i32
    %c0_i32_1 = arith.constant 0 : i32
    return %c0_i32, %c0_i32_0 : i32, i32
  }
  func.func @transform_2(%arg0: i32, %arg1: i32) -> (i32, i32) {
    %c0_i32 = arith.constant 0 : i32
    %c0_i32_0 = arith.constant 0 : i32
    %c0_i32_1 = arith.constant 0 : i32
    return %c0_i32, %c0_i32_0 : i32, i32
  }
  func.func @transform_3(%arg0: i32, %arg1: i32) -> (i32, i32) {
    %c0_i32 = arith.constant 0 : i32
    %c0_i32_0 = arith.constant 0 : i32
    %c0_i32_1 = arith.constant 0 : i32
    return %c0_i32, %c0_i32_0 : i32, i32
  }
  func.func @transform_4(%arg0: i32, %arg1: i32) -> (i32, i32) {
    %c0_i32 = arith.constant 0 : i32
    %c0_i32_0 = arith.constant 0 : i32
    %c0_i32_1 = arith.constant 0 : i32
    return %c0_i32, %c0_i32_0 : i32, i32
  }
  func.func @transform_5(%arg0: i32, %arg1: i32) -> (i32, i32) {
    %c0_i32 = arith.constant 0 : i32
    %c0_i32_0 = arith.constant 0 : i32
    %c0_i32_1 = arith.constant 0 : i32
    return %c0_i32, %c0_i32_0 : i32, i32
  }
  func.func @transform_6(%arg0: i32, %arg1: i32) -> (i32, i32) {
    %c0_i32 = arith.constant 0 : i32
    %c0_i32_0 = arith.constant 0 : i32
    %c0_i32_1 = arith.constant 0 : i32
    return %c0_i32, %c0_i32_0 : i32, i32
  }
  func.func @transform_7(%arg0: i32, %arg1: i32) -> (i32, i32) {
    %c0_i32 = arith.constant 0 : i32
    %c0_i32_0 = arith.constant 0 : i32
    return %arg0, %c0_i32 : i32, i32
  }
}

module attributes {stable_mosaic.version = 11 : i64} {
  func.func @_classifier_kernel(%arg0: i32, %arg1: i32, %arg2: memref<8x16x128xbf16, #tpu.memory_space<vmem>>, %arg3: memref<128x64xf32, #tpu.memory_space<vmem>>, %arg4: memref<1x64xf32, #tpu.memory_space<vmem>>, %arg5: memref<64x32xf32, #tpu.memory_space<vmem>>, %arg6: memref<1x32xf32, #tpu.memory_space<vmem>>, %arg7: memref<32x8xf32, #tpu.memory_space<vmem>>, %arg8: memref<1x8xf32, #tpu.memory_space<vmem>>, %arg9: memref<8x8xf32, #tpu.memory_space<vmem>>, %arg10: memref<8x128xf32, #tpu.memory_space<vmem>>) attributes {dimension_semantics = [#tpu.dimension_semantics<parallel>, #tpu.dimension_semantics<arbitrary>], iteration_bounds = array<i64: 1, 1>, scalar_prefetch = 0 : i64, scratch_operands = 1 : i64, tpu.core_type = #tpu.core_type<tc>, window_params = [{transform_indices = @transform_0, window_bounds = array<i64: 8, 16, 128>}, {pipeline_mode = #tpu.pipeline_mode<synchronous>, transform_indices = @transform_1, window_bounds = array<i64: 128, 64>}, {pipeline_mode = #tpu.pipeline_mode<synchronous>, transform_indices = @transform_2, window_bounds = array<i64: 1, 64>}, {pipeline_mode = #tpu.pipeline_mode<synchronous>, transform_indices = @transform_3, window_bounds = array<i64: 64, 32>}, {pipeline_mode = #tpu.pipeline_mode<synchronous>, transform_indices = @transform_4, window_bounds = array<i64: 1, 32>}, {pipeline_mode = #tpu.pipeline_mode<synchronous>, transform_indices = @transform_5, window_bounds = array<i64: 32, 8>}, {pipeline_mode = #tpu.pipeline_mode<synchronous>, transform_indices = @transform_6, window_bounds = array<i64: 1, 8>}, {transform_indices = @transform_7, window_bounds = array<i64: 8, 8>}]} {
    %c0_i32 = arith.constant 0 : i32
    %0 = arith.cmpi eq, %arg1, %c0_i32 : i32
    %1 = arith.extui %0 : i1 to i32
    %c0_i32_0 = arith.constant 0 : i32
    %2 = arith.cmpi ne, %1, %c0_i32_0 : i32
    scf.if %2 {
      %cst_9 = arith.constant 0.000000e+00 : f32
      %12 = vector.broadcast %cst_9 : f32 to vector<8x128xf32>
      %c0_10 = arith.constant 0 : index
      %c0_11 = arith.constant 0 : index
      %13 = vector.load %arg10[%c0_10, %c0_11] : memref<8x128xf32, #tpu.memory_space<vmem>>, vector<8x128xf32>
      tpu.vector_store %arg10[%c0_10, %c0_11], %12 {strides = array<i32>} : memref<8x128xf32, #tpu.memory_space<vmem>>, vector<8x128xf32>,
    } else {
    }
    %c0 = arith.constant 0 : index
    %c0_1 = arith.constant 0 : index
    %3 = vector.load %arg10[%c0, %c0_1] : memref<8x128xf32, #tpu.memory_space<vmem>>, vector<8x128xf32>
    %c0_2 = arith.constant 0 : index
    %c0_3 = arith.constant 0 : index
    %c0_4 = arith.constant 0 : index
    %4 = vector.load %arg2[%c0_2, %c0_3, %c0_4] : memref<8x16x128xbf16, #tpu.memory_space<vmem>>, vector<8x16x128xbf16>
    %5 = arith.extf %4 : vector<8x16x128xbf16> to vector<8x16x128xf32>
    %cst = arith.constant dense<0.000000e+00> : vector<8x128xf32>
    %6 = vector.multi_reduction <add>, %5, %cst [1] : vector<8x16x128xf32> to vector<8x128xf32>
    %7 = arith.addf %3, %6 : vector<8x128xf32>
    %c0_5 = arith.constant 0 : index
    %c0_6 = arith.constant 0 : index
    %8 = vector.load %arg10[%c0_5, %c0_6] : memref<8x128xf32, #tpu.memory_space<vmem>>, vector<8x128xf32>
    tpu.vector_store %arg10[%c0_5, %c0_6], %7 {strides = array<i32>} : memref<8x128xf32, #tpu.memory_space<vmem>>, vector<8x128xf32>,
    %c0_i32_7 = arith.constant 0 : i32
    %9 = arith.cmpi eq, %arg1, %c0_i32_7 : i32
    %10 = arith.extui %9 : i1 to i32
    %c0_i32_8 = arith.constant 0 : i32
    %11 = arith.cmpi ne, %10, %c0_i32_8 : i32
    scf.if %11 {
      %c0_9 = arith.constant 0 : index
      %c0_10 = arith.constant 0 : index
      %12 = vector.load %arg10[%c0_9, %c0_10] : memref<8x128xf32, #tpu.memory_space<vmem>>, vector<8x128xf32>
      %cst_11 = arith.constant 6.250000e-02 : f32
      %13 = vector.broadcast %cst_11 : f32 to vector<8x128xf32>
      %14 = arith.mulf %12, %13 : vector<8x128xf32>
      %c0_12 = arith.constant 0 : index
      %c0_13 = arith.constant 0 : index
      %15 = vector.load %arg3[%c0_12, %c0_13] : memref<128x64xf32, #tpu.memory_space<vmem>>, vector<128x64xf32>
      %cst_14 = arith.constant dense<0.000000e+00> : vector<8x64xf32>
      %16 = tpu.matmul %14, %15, %cst_14 {dimension_numbers = #tpu.dot_dimension_numbers<[1], [0], [0], [1], [0, 0, 1, 1], [], []>} : vector<8x128xf32>, vector<128x64xf32>, vector<8x64xf32> -> vector<8x64xf32>
      %c0_15 = arith.constant 0 : index
      %c0_16 = arith.constant 0 : index
      %17 = vector.load %arg4[%c0_15, %c0_16] : memref<1x64xf32, #tpu.memory_space<vmem>>, vector<1x64xf32>
      %18 = vector.broadcast %17 : vector<1x64xf32> to vector<8x64xf32>
      %19 = arith.addf %16, %18 : vector<8x64xf32>
      %cst_17 = arith.constant 0.000000e+00 : f32
      %20 = vector.broadcast %cst_17 : f32 to vector<8x64xf32>
      %21 = arith.maximumf %19, %20 : vector<8x64xf32>
      %c0_18 = arith.constant 0 : index
      %c0_19 = arith.constant 0 : index
      %22 = vector.load %arg5[%c0_18, %c0_19] : memref<64x32xf32, #tpu.memory_space<vmem>>, vector<64x32xf32>
      %cst_20 = arith.constant dense<0.000000e+00> : vector<8x32xf32>
      %23 = tpu.matmul %21, %22, %cst_20 {dimension_numbers = #tpu.dot_dimension_numbers<[1], [0], [0], [1], [0, 0, 1, 1], [], []>} : vector<8x64xf32>, vector<64x32xf32>, vector<8x32xf32> -> vector<8x32xf32>
      %c0_21 = arith.constant 0 : index
      %c0_22 = arith.constant 0 : index
      %24 = vector.load %arg6[%c0_21, %c0_22] : memref<1x32xf32, #tpu.memory_space<vmem>>, vector<1x32xf32>
      %25 = vector.broadcast %24 : vector<1x32xf32> to vector<8x32xf32>
      %26 = arith.addf %23, %25 : vector<8x32xf32>
      %cst_23 = arith.constant 0.000000e+00 : f32
      %27 = vector.broadcast %cst_23 : f32 to vector<8x32xf32>
      %28 = arith.maximumf %26, %27 : vector<8x32xf32>
      %c0_24 = arith.constant 0 : index
      %c0_25 = arith.constant 0 : index
      %29 = vector.load %arg7[%c0_24, %c0_25] : memref<32x8xf32, #tpu.memory_space<vmem>>, vector<32x8xf32>
      %cst_26 = arith.constant dense<0.000000e+00> : vector<8x8xf32>
      %30 = tpu.matmul %28, %29, %cst_26 {dimension_numbers = #tpu.dot_dimension_numbers<[1], [0], [0], [1], [0, 0, 1, 1], [], []>} : vector<8x32xf32>, vector<32x8xf32>, vector<8x8xf32> -> vector<8x8xf32>
      %c0_27 = arith.constant 0 : index
      %c0_28 = arith.constant 0 : index
      %31 = vector.load %arg8[%c0_27, %c0_28] : memref<1x8xf32, #tpu.memory_space<vmem>>, vector<1x8xf32>
      %32 = vector.broadcast %31 : vector<1x8xf32> to vector<8x8xf32>
      %33 = arith.addf %30, %32 : vector<8x8xf32>
      %c0_29 = arith.constant 0 : index
      %c0_30 = arith.constant 0 : index
      %34 = vector.load %arg9[%c0_29, %c0_30] : memref<8x8xf32, #tpu.memory_space<vmem>>, vector<8x8xf32>
      tpu.vector_store %arg9[%c0_29, %c0_30], %33 {strides = array<i32>} : memref<8x8xf32, #tpu.memory_space<vmem>>, vector<8x8xf32>,
    } else {
    }
    return
  }
  func.func @transform_0(%arg0: i32, %arg1: i32) -> (i32, i32, i32) {
    %c0_i32 = arith.constant 0 : i32
    %c0_i32_0 = arith.constant 0 : i32
    return %arg0, %arg1, %c0_i32 : i32, i32, i32
  }
  func.func @transform_1(%arg0: i32, %arg1: i32) -> (i32, i32) {
    %c0_i32 = arith.constant 0 : i32
    %c0_i32_0 = arith.constant 0 : i32
    %c0_i32_1 = arith.constant 0 : i32
    return %c0_i32, %c0_i32_0 : i32, i32
  }
  func.func @transform_2(%arg0: i32, %arg1: i32) -> (i32, i32) {
    %c0_i32 = arith.constant 0 : i32
    %c0_i32_0 = arith.constant 0 : i32
    %c0_i32_1 = arith.constant 0 : i32
    return %c0_i32, %c0_i32_0 : i32, i32
  }
  func.func @transform_3(%arg0: i32, %arg1: i32) -> (i32, i32) {
    %c0_i32 = arith.constant 0 : i32
    %c0_i32_0 = arith.constant 0 : i32
    %c0_i32_1 = arith.constant 0 : i32
    return %c0_i32, %c0_i32_0 : i32, i32
  }
  func.func @transform_4(%arg0: i32, %arg1: i32) -> (i32, i32) {
    %c0_i32 = arith.constant 0 : i32
    %c0_i32_0 = arith.constant 0 : i32
    %c0_i32_1 = arith.constant 0 : i32
    return %c0_i32, %c0_i32_0 : i32, i32
  }
  func.func @transform_5(%arg0: i32, %arg1: i32) -> (i32, i32) {
    %c0_i32 = arith.constant 0 : i32
    %c0_i32_0 = arith.constant 0 : i32
    %c0_i32_1 = arith.constant 0 : i32
    return %c0_i32, %c0_i32_0 : i32, i32
  }
  func.func @transform_6(%arg0: i32, %arg1: i32) -> (i32, i32) {
    %c0_i32 = arith.constant 0 : i32
    %c0_i32_0 = arith.constant 0 : i32
    %c0_i32_1 = arith.constant 0 : i32
    return %c0_i32, %c0_i32_0 : i32, i32
  }
  func.func @transform_7(%arg0: i32, %arg1: i32) -> (i32, i32) {
    %c0_i32 = arith.constant 0 : i32
    %c0_i32_0 = arith.constant 0 : i32
    return %arg0, %c0_i32 : i32, i32
  }
}

</mosaic_0001>

<llo_original>
// kernel: tpu_custom_call.1
$region0: #{tpu_custom_call.1}
  #allocation0 [shape = 'u32[]', space=smem, size = 0x4, offset = 0x4, fixed_abs, tag = 'smem constant byte address 0x4 - core index']
  #allocation1 [shape = 'u32[72,128]{1,0:T(1,128)}', space=vmem, size = 0x9000, scoped, tag = 'internal scratch']
  #allocation2 [shape = 'f32[8,128]{1,0:T(8,128)}', space=vmem, size = 0x1000, scoped, tag = 'scratch operand']
  %s0 = inlined_call_operand.vmem [shape: bf16[8,16,128], index: 0, kind: input, shape index: {}]
  %s1 = inlined_call_operand.vmem [shape: f32[128,64], index: 1, kind: input, shape index: {}]
  %s2 = inlined_call_operand.vmem [shape: f32[1,64], index: 2, kind: input, shape index: {}]
  %s3 = inlined_call_operand.vmem [shape: f32[64,32], index: 3, kind: input, shape index: {}]
  %s4 = inlined_call_operand.vmem [shape: f32[1,32], index: 4, kind: input, shape index: {}]
  %s5 = inlined_call_operand.vmem [shape: f32[32,8], index: 5, kind: input, shape index: {}]
  %s6 = inlined_call_operand.vmem [shape: f32[1,8], index: 6, kind: input, shape index: {}]
  %s7 = inlined_call_operand.hbm [shape: f32[8,8], index: 7, kind: output, shape index: {}]
  %s8 = sld [smem:[#allocation0]]
  $region46: #{tpu_custom_call.1} parent=0
    _
  %s10 = ssub.s32 1, %s8
  %s11 = scalar_select 0, %s10, %s8
  $region1: #{tpu_custom_call.1} parent=0
    #allocation3 [shape = 'u8[4096]{0}', space=vmem, size = 0x1000, scoped, tag = 'output window, operand 0, single buffered']
    #allocation4 [shape = 's32[1]{0}', space=sflag, size = 0x4, scoped, tag = 'scoped memory for tpu_custom_call.1']
    %12 = vsyncpa [#allocation4], 0
    // Predicated region
    $region2: #{tpu_custom_call.1} parent=1 // pred_check
      _
    $region3: #{tpu_custom_call.1} parent=1 // pred_check_branch
      %14 = sbr.rel (0) target = $region5
    $region4: #{tpu_custom_call.1} parent=1 // pred_region
      _
    $region5: #{tpu_custom_call.1} parent=1 // pred_fallthru
      _
    // Predicated region
    $region6: #{tpu_custom_call.1} parent=1 // pred_check
      _
    $region7: #{tpu_custom_call.1} parent=1 // pred_check_branch
      %16 = sbr.rel (0) target = $region9
    $region8: #{tpu_custom_call.1} parent=1 // pred_region
      _
    $region9: #{tpu_custom_call.1} parent=1 // pred_fallthru
      _
    // Predicated region
    $region10: #{tpu_custom_call.1} parent=1 // pred_check
      _
    $region11: #{tpu_custom_call.1} parent=1 // pred_check_branch
      %18 = sbr.rel (0) target = $region13
    $region12: #{tpu_custom_call.1} parent=1 // pred_region
      _
    $region13: #{tpu_custom_call.1} parent=1 // pred_fallthru
      _
    // Predicated region
    $region14: #{tpu_custom_call.1} parent=1 // pred_check
      _
    $region15: #{tpu_custom_call.1} parent=1 // pred_check_branch
      %20 = sbr.rel (0) target = $region17
    $region16: #{tpu_custom_call.1} parent=1 // pred_region
      _
    $region17: #{tpu_custom_call.1} parent=1 // pred_fallthru
      _
    // Predicated region
    $region18: #{tpu_custom_call.1} parent=1 // pred_check
      _
    $region19: #{tpu_custom_call.1} parent=1 // pred_check_branch
      %22 = sbr.rel (0) target = $region21
    $region20: #{tpu_custom_call.1} parent=1 // pred_region
      _
    $region21: #{tpu_custom_call.1} parent=1 // pred_fallthru
      _
    // Predicated region
    $region22: #{tpu_custom_call.1} parent=1 // pred_check
      _
    $region23: #{tpu_custom_call.1} parent=1 // pred_check_branch
      %24 = sbr.rel (0) target = $region25
    $region24: #{tpu_custom_call.1} parent=1 // pred_region
      _
    $region25: #{tpu_custom_call.1} parent=1 // pred_fallthru
      _
    // Predicated region
    $region26: #{tpu_custom_call.1} parent=1 // pred_check
      _
    $region27: #{tpu_custom_call.1} parent=1 // pred_check_branch
      %26 = sbr.rel (0) target = $region29
    $region28: #{tpu_custom_call.1} parent=1 // pred_region
      _
    $region29: #{tpu_custom_call.1} parent=1 // pred_fallthru
      _
    %p27 = scmp.eq.s32.totalorder 0, 0
    // Predicated region
    $region30: #{tpu_custom_call.1} parent=1 // pred_check
      %p28 = pneg %p27
    $region31: #{tpu_custom_call.1} parent=1 // pred_check_branch
      %30 = sbr.rel (%p28) target = $region33
    $region32: #{tpu_custom_call.1} parent=1 // pred_region
      %31 = vst [vmem:[#allocation2] sm:$0xff] 0.0
    $region33: #{tpu_custom_call.1} parent=1 // pred_fallthru
      _
    %v32 = vld [vmem:[#allocation2] sm:$0xff]
    %v33 = vld [vmem:[%s0] sm:$0xf]
    %v34 = vld [vmem:[%s0 + $0x4] sm:$0xf]
    %v35 = vld [vmem:[%s0 + $0x8] sm:$0xf]
    %v36 = vld [vmem:[%s0 + $0xc] sm:$0xf]
    %v37 = vld [vmem:[%s0 + $0x10] sm:$0xf]
    %v38 = vld [vmem:[%s0 + $0x14] sm:$0xf]
    %v39 = vld [vmem:[%s0 + $0x18] sm:$0xf]
    %v40 = vld [vmem:[%s0 + $0x1c] sm:$0xf]
    %v41 = vld [vmem:[%s0 + $0x20] sm:$0xf]
    %v42 = vld [vmem:[%s0 + $0x24] sm:$0xf]
    %v43 = vld [vmem:[%s0 + $0x28] sm:$0xf]
    %v44 = vld [vmem:[%s0 + $0x2c] sm:$0xf]
    %v45 = vld [vmem:[%s0 + $0x30] sm:$0xf]
    %v46 = vld [vmem:[%s0 + $0x34] sm:$0xf]
    %v47 = vld [vmem:[%s0 + $0x38] sm:$0xf]
    %v48 = vld [vmem:[%s0 + $0x3c] sm:$0xf]
    %v49 = vunpack.c.l.bf16 %v33
    %v50 = vunpack.c.l.bf16 %v34
    %v51 = vunpack.c.l.bf16 %v35
    %v52 = vunpack.c.l.bf16 %v36
    %v53 = vunpack.c.l.bf16 %v37
    %v54 = vunpack.c.l.bf16 %v38
    %v55 = vunpack.c.l.bf16 %v39
    %v56 = vunpack.c.l.bf16 %v40
    %v57 = vunpack.c.l.bf16 %v41
    %v58 = vunpack.c.l.bf16 %v42
    %v59 = vunpack.c.l.bf16 %v43
    %v60 = vunpack.c.l.bf16 %v44
    %v61 = vunpack.c.l.bf16 %v45
    %v62 = vunpack.c.l.bf16 %v46
    %v63 = vunpack.c.l.bf16 %v47
    %v64 = vunpack.c.l.bf16 %v48
    %v65 = vadd.f32 %v49, %v50
    %v66 = vrot.slane %v65, 4
    %v67 = vadd.f32 %v65, %v66
    %v68 = vrot.slane %v67, 2
    %v69 = vadd.f32 %v67, %v68
    %v70 = vrot.slane %v69, 1
    %v71 = vadd.f32 %v69, %v70
    %v72 = vadd.f32 %v51, %v52
    %v73 = vrot.slane %v72, 4
    %v74 = vadd.f32 %v72, %v73
    %v75 = vrot.slane %v74, 2
    %v76 = vadd.f32 %v74, %v75
    %v77 = vrot.slane %v76, 1
    %v78 = vadd.f32 %v76, %v77
    %v79 = vadd.f32 %v53, %v54
    %v80 = vrot.slane %v79, 4
    %v81 = vadd.f32 %v79, %v80
    %v82 = vrot.slane %v81, 2
    %v83 = vadd.f32 %v81, %v82
    %v84 = vrot.slane %v83, 1
    %v85 = vadd.f32 %v83, %v84
    %v86 = vadd.f32 %v55, %v56
    %v87 = vrot.slane %v86, 4
    %v88 = vadd.f32 %v86, %v87
    %v89 = vrot.slane %v88, 2
    %v90 = vadd.f32 %v88, %v89
    %v91 = vrot.slane %v90, 1
    %v92 = vadd.f32 %v90, %v91
    %v93 = vadd.f32 %v57, %v58
    %v94 = vrot.slane %v93, 4
    %v95 = vadd.f32 %v93, %v94
    %v96 = vrot.slane %v95, 2
    %v97 = vadd.f32 %v95, %v96
    %v98 = vrot.slane %v97, 1
    %v99 = vadd.f32 %v97, %v98
    %v100 = vadd.f32 %v59, %v60
    %v101 = vrot.slane %v100, 4
    %v102 = vadd.f32 %v100, %v101
    %v103 = vrot.slane %v102, 2
    %v104 = vadd.f32 %v102, %v103
    %v105 = vrot.slane %v104, 1
    %v106 = vadd.f32 %v104, %v105
    %v107 = vadd.f32 %v61, %v62
    %v108 = vrot.slane %v107, 4
    %v109 = vadd.f32 %v107, %v108
    %v110 = vrot.slane %v109, 2
    %v111 = vadd.f32 %v109, %v110
    %v112 = vrot.slane %v111, 1
    %v113 = vadd.f32 %v111, %v112
    %v114 = vadd.f32 %v63, %v64
    %v115 = vrot.slane %v114, 4
    %v116 = vadd.f32 %v114, %v115
    %v117 = vrot.slane %v116, 2
    %v118 = vadd.f32 %v116, %v117
    %v119 = vrot.slane %v118, 1
    %v120 = vadd.f32 %v118, %v119
    %vm129 = vcmask 1041409
    %v130 = vsel %vm129, %v78, %v71
    %vm131 = vcmask 1042434
    %v132 = vsel %vm131, %v85, %v130
    %vm133 = vcmask 1043459
    %v134 = vsel %vm133, %v92, %v132
    %vm135 = vcmask 1044484
    %v136 = vsel %vm135, %v99, %v134
    %vm137 = vcmask 1045509
    %v138 = vsel %vm137, %v106, %v136
    %vm139 = vcmask 1046534
    %v140 = vsel %vm139, %v113, %v138
    %vm141 = vcmask 1047559
    %v142 = vsel %vm141, %v120, %v140
    %v144 = vadd.f32 %v32, %v142
    %145 = vst [vmem:[#allocation2] sm:$0xff] %v144
    // Predicated region
    $region34: #{tpu_custom_call.1} parent=1 // pred_check
      %p146 = pneg %p27
    $region35: #{tpu_custom_call.1} parent=1 // pred_check_branch
      %148 = sbr.rel (%p146) target = $region37
    $region36: #{tpu_custom_call.1} parent=1 // pred_region
      %v149 = vld [vmem:[#allocation2] sm:$0xff]
      %v150 = vmul.f32 %v149, 0.0625
      %v151 = vld [vmem:[%s1] sm:$0xff]
      %v152 = vld [vmem:[%s1 + $0x8] sm:$0xff]
      %v153 = vld [vmem:[%s1 + $0x10] sm:$0xff]
      %v154 = vld [vmem:[%s1 + $0x18] sm:$0xff]
      %v155 = vld [vmem:[%s1 + $0x20] sm:$0xff]
      %v156 = vld [vmem:[%s1 + $0x28] sm:$0xff]
      %v157 = vld [vmem:[%s1 + $0x30] sm:$0xff]
      %v158 = vld [vmem:[%s1 + $0x38] sm:$0xff]
      %v159 = vld [vmem:[%s1 + $0x40] sm:$0xff]
      %v160 = vld [vmem:[%s1 + $0x48] sm:$0xff]
      %v161 = vld [vmem:[%s1 + $0x50] sm:$0xff]
      %v162 = vld [vmem:[%s1 + $0x58] sm:$0xff]
      %v163 = vld [vmem:[%s1 + $0x60] sm:$0xff]
      %v164 = vld [vmem:[%s1 + $0x68] sm:$0xff]
      %v165 = vld [vmem:[%s1 + $0x70] sm:$0xff]
      %v166 = vld [vmem:[%s1 + $0x78] sm:$0xff]
      %v167 = vld [vmem:[%s2] sm:$0x1]
      %v169 = vperm.slane %v167, 0
      %171 = vmatpush.msra.mxu0 %v166
      %172 = vmatpush.msra.mxu0 %v165
      %173 = vmatpush.msra.mxu0 %v164
      %174 = vmatpush.msra.mxu0 %v163
      %175 = vmatpush.msra.mxu0 %v162
      %176 = vmatpush.msra.mxu0 %v161
      %177 = vmatpush.msra.mxu0 %v160
      %178 = vmatpush.msra.mxu0 %v159
      %179 = vmatpush.msra.mxu0 %v158
      %180 = vmatpush.msra.mxu0 %v157
      %181 = vmatpush.msra.mxu0 %v156
      %182 = vmatpush.msra.mxu0 %v155
      %183 = vmatpush.msra.mxu0 %v154
      %184 = vmatpush.msra.mxu0 %v153
      %185 = vmatpush.msra.mxu0 %v152
      %186 = vmatpush.msra.mxu0 %v151
      %187 = vmatmul.f32.gmra.mxu0 %v150
      %v188 = vpop.f32.mrf.mxu0
      %v189 = vadd.f32 %v169, %v188
      %190 = vdwg.mxu0
      %v191 = vmax.f32 %v189, 0.0
      %v192 = vld [vmem:[%s3] sm:$0xff]
      %v193 = vld [vmem:[%s3 + $0x8] sm:$0xff]
      %v194 = vld [vmem:[%s3 + $0x10] sm:$0xff]
      %v195 = vld [vmem:[%s3 + $0x18] sm:$0xff]
      %v196 = vld [vmem:[%s3 + $0x20] sm:$0xff]
      %v197 = vld [vmem:[%s3 + $0x28] sm:$0xff]
      %v198 = vld [vmem:[%s3 + $0x30] sm:$0xff]
      %v199 = vld [vmem:[%s3 + $0x38] sm:$0xff]
      %v200 = vld [vmem:[%s4] sm:$0x1]
      %v202 = vperm.slane %v200, 0
      %vm204 = vcmask 523264
      %v206 = vsel %vm204, %v191, 0
      %208 = vmatpush.msra.mxu0 0.0
      %209 = vmatpush.msra.mxu0 0.0
      %210 = vmatpush.msra.mxu0 0.0
      %211 = vmatpush.msra.mxu0 0.0
      %212 = vmatpush.msra.mxu0 0.0
      %213 = vmatpush.msra.mxu0 0.0
      %214 = vmatpush.msra.mxu0 0.0
      %215 = vmatpush.msra.mxu0 0.0
      %216 = vmatpush.msra.mxu0 %v199
      %217 = vmatpush.msra.mxu0 %v198
      %218 = vmatpush.msra.mxu0 %v197
      %219 = vmatpush.msra.mxu0 %v196
      %220 = vmatpush.msra.mxu0 %v195
      %221 = vmatpush.msra.mxu0 %v194
      %222 = vmatpush.msra.mxu0 %v193
      %223 = vmatpush.msra.mxu0 %v192
      %224 = vmatmul.f32.gmra.mxu0 %v206
      %v225 = vpop.f32.mrf.mxu0
      %v226 = vadd.f32 %v202, %v225
      %227 = vdwg.mxu0
      %v228 = vmax.f32 %v226, 0.0
      %v229 = vld [vmem:[%s5] sm:$0xff]
      %v230 = vld [vmem:[%s5 + $0x8] sm:$0xff]
      %v231 = vld [vmem:[%s5 + $0x10] sm:$0xff]
      %v232 = vld [vmem:[%s5 + $0x18] sm:$0xff]
      %v233 = vld [vmem:[%s6] sm:$0x1]
      %v235 = vperm.slane %v233, 0
      %vm237 = vcmask 261120
      %v239 = vsel %vm237, %v228, 0
      %241 = vmatpush.msra.mxu0 0.0
      %242 = vmatpush.msra.mxu0 0.0
      %243 = vmatpush.msra.mxu0 0.0
      %244 = vmatpush.msra.mxu0 0.0
      %245 = vmatpush.msra.mxu0 0.0
      %246 = vmatpush.msra.mxu0 0.0
      %247 = vmatpush.msra.mxu0 0.0
      %248 = vmatpush.msra.mxu0 0.0
      %249 = vmatpush.msra.mxu0 0.0
      %250 = vmatpush.msra.mxu0 0.0
      %251 = vmatpush.msra.mxu0 0.0
      %252 = vmatpush.msra.mxu0 0.0
      %253 = vmatpush.msra.mxu0 %v232
      %254 = vmatpush.msra.mxu0 %v231
      %255 = vmatpush.msra.mxu0 %v230
      %256 = vmatpush.msra.mxu0 %v229
      %257 = vmatmul.f32.gmra.mxu0 %v239
      %v258 = vpop.f32.mrf.mxu0
      %v259 = vadd.f32 %v235, %v258
      %260 = vdwg.mxu0
      %vm261 = vcmask 64512
      %262 = vst.msk [vmem:[#allocation3] sm:$0xff] %vm261, %v259
    $region37: #{tpu_custom_call.1} parent=1 // pred_fallthru
      _
    // Predicated region
    $region38: #{tpu_custom_call.1} parent=1 // pred_check
      _
    $region39: #{tpu_custom_call.1} parent=1 // pred_check_branch
      %264 = sbr.rel (0) target = $region41
    $region40: #{tpu_custom_call.1} parent=1 // pred_region
      %266 = vsyncadd [#allocation4], 0
      %s268 = sshll.u32 [#allocation3], 4
      %s269 = int_to_ptr.vmem [resolvable:$true] %s268
      %s270 = sshll.u32 %s7, 4
      %s271 = int_to_ptr.hbm [resolvable:$true] %s270
      %273 = dma.vmem_to_hbm [thread:$0]  %s269, 128, %s271, [#allocation4]
    $region41: #{tpu_custom_call.1} parent=1 // pred_fallthru
      _
    // Predicated region
    $region42: #{tpu_custom_call.1} parent=1 // pred_check
      _
    $region43: #{tpu_custom_call.1} parent=1 // pred_check_branch
      %275 = sbr.rel (0) target = $region45
    $region44: #{tpu_custom_call.1} parent=1 // pred_region
      %277 = dma.done [#allocation4], 128
    $region45: #{tpu_custom_call.1} parent=1 // pred_fallthru
      _
    %278 = vsyncpa [#allocation4], 1

// kernel: tpu_custom_call.1
$region0: #{tpu_custom_call.1}
  #allocation0 [shape = 'u32[]', space=smem, size = 0x4, offset = 0x4, fixed_abs, tag = 'smem constant byte address 0x4 - core index']
  #allocation1 [shape = 'u32[72,128]{1,0:T(1,128)}', space=vmem, size = 0x9000, scoped, tag = 'internal scratch']
  #allocation2 [shape = 'f32[8,128]{1,0:T(8,128)}', space=vmem, size = 0x1000, scoped, tag = 'scratch operand']
  %s0 = inlined_call_operand.vmem [shape: bf16[8,16,128], index: 0, kind: input, shape index: {}]
  %s1 = inlined_call_operand.vmem [shape: f32[128,64], index: 1, kind: input, shape index: {}]
  %s2 = inlined_call_operand.vmem [shape: f32[1,64], index: 2, kind: input, shape index: {}]
  %s3 = inlined_call_operand.vmem [shape: f32[64,32], index: 3, kind: input, shape index: {}]
  %s4 = inlined_call_operand.vmem [shape: f32[1,32], index: 4, kind: input, shape index: {}]
  %s5 = inlined_call_operand.vmem [shape: f32[32,8], index: 5, kind: input, shape index: {}]
  %s6 = inlined_call_operand.vmem [shape: f32[1,8], index: 6, kind: input, shape index: {}]
  %s7 = inlined_call_operand.hbm [shape: f32[8,8], index: 7, kind: output, shape index: {}]
  %s8 = sld [smem:[#allocation0]]
  $region46: #{tpu_custom_call.1} parent=0
    _
  %s10 = ssub.s32 1, %s8
  %s11 = scalar_select 0, %s10, %s8
  $region1: #{tpu_custom_call.1} parent=0
    #allocation3 [shape = 'u8[4096]{0}', space=vmem, size = 0x1000, scoped, tag = 'output window, operand 0, single buffered']
    #allocation4 [shape = 's32[1]{0}', space=sflag, size = 0x4, scoped, tag = 'scoped memory for tpu_custom_call.1']
    %12 = vsyncpa [#allocation4], 0
    // Predicated region
    $region2: #{tpu_custom_call.1} parent=1 // pred_check
      _
    $region3: #{tpu_custom_call.1} parent=1 // pred_check_branch
      %14 = sbr.rel (0) target = $region5
    $region4: #{tpu_custom_call.1} parent=1 // pred_region
      _
    $region5: #{tpu_custom_call.1} parent=1 // pred_fallthru
      _
    // Predicated region
    $region6: #{tpu_custom_call.1} parent=1 // pred_check
      _
    $region7: #{tpu_custom_call.1} parent=1 // pred_check_branch
      %16 = sbr.rel (0) target = $region9
    $region8: #{tpu_custom_call.1} parent=1 // pred_region
      _
    $region9: #{tpu_custom_call.1} parent=1 // pred_fallthru
      _
    // Predicated region
    $region10: #{tpu_custom_call.1} parent=1 // pred_check
      _
    $region11: #{tpu_custom_call.1} parent=1 // pred_check_branch
      %18 = sbr.rel (0) target = $region13
    $region12: #{tpu_custom_call.1} parent=1 // pred_region
      _
    $region13: #{tpu_custom_call.1} parent=1 // pred_fallthru
      _
    // Predicated region
    $region14: #{tpu_custom_call.1} parent=1 // pred_check
      _
    $region15: #{tpu_custom_call.1} parent=1 // pred_check_branch
      %20 = sbr.rel (0) target = $region17
    $region16: #{tpu_custom_call.1} parent=1 // pred_region
      _
    $region17: #{tpu_custom_call.1} parent=1 // pred_fallthru
      _
    // Predicated region
    $region18: #{tpu_custom_call.1} parent=1 // pred_check
      _
    $region19: #{tpu_custom_call.1} parent=1 // pred_check_branch
      %22 = sbr.rel (0) target = $region21
    $region20: #{tpu_custom_call.1} parent=1 // pred_region
      _
    $region21: #{tpu_custom_call.1} parent=1 // pred_fallthru
      _
    // Predicated region
    $region22: #{tpu_custom_call.1} parent=1 // pred_check
      _
    $region23: #{tpu_custom_call.1} parent=1 // pred_check_branch
      %24 = sbr.rel (0) target = $region25
    $region24: #{tpu_custom_call.1} parent=1 // pred_region
      _
    $region25: #{tpu_custom_call.1} parent=1 // pred_fallthru
      _
    // Predicated region
    $region26: #{tpu_custom_call.1} parent=1 // pred_check
      _
    $region27: #{tpu_custom_call.1} parent=1 // pred_check_branch
      %26 = sbr.rel (0) target = $region29
    $region28: #{tpu_custom_call.1} parent=1 // pred_region
      _
    $region29: #{tpu_custom_call.1} parent=1 // pred_fallthru
      _
    %p27 = scmp.eq.s32.totalorder 0, 0
    // Predicated region
    $region30: #{tpu_custom_call.1} parent=1 // pred_check
      %p28 = pneg %p27
    $region31: #{tpu_custom_call.1} parent=1 // pred_check_branch
      %30 = sbr.rel (%p28) target = $region33
    $region32: #{tpu_custom_call.1} parent=1 // pred_region
      %31 = vst [vmem:[#allocation2] sm:$0xff] 0.0
    $region33: #{tpu_custom_call.1} parent=1 // pred_fallthru
      _
    %v32 = vld [vmem:[#allocation2] sm:$0xff]
    %v33 = vld [vmem:[%s0] sm:$0xf]
    %v34 = vld [vmem:[%s0 + $0x4] sm:$0xf]
    %v35 = vld [vmem:[%s0 + $0x8] sm:$0xf]
    %v36 = vld [vmem:[%s0 + $0xc] sm:$0xf]
    %v37 = vld [vmem:[%s0 + $0x10] sm:$0xf]
    %v38 = vld [vmem:[%s0 + $0x14] sm:$0xf]
    %v39 = vld [vmem:[%s0 + $0x18] sm:$0xf]
    %v40 = vld [vmem:[%s0 + $0x1c] sm:$0xf]
    %v41 = vld [vmem:[%s0 + $0x20] sm:$0xf]
    %v42 = vld [vmem:[%s0 + $0x24] sm:$0xf]
    %v43 = vld [vmem:[%s0 + $0x28] sm:$0xf]
    %v44 = vld [vmem:[%s0 + $0x2c] sm:$0xf]
    %v45 = vld [vmem:[%s0 + $0x30] sm:$0xf]
    %v46 = vld [vmem:[%s0 + $0x34] sm:$0xf]
    %v47 = vld [vmem:[%s0 + $0x38] sm:$0xf]
    %v48 = vld [vmem:[%s0 + $0x3c] sm:$0xf]
    %v49 = vunpack.c.l.bf16 %v33
    %v50 = vunpack.c.l.bf16 %v34
    %v51 = vunpack.c.l.bf16 %v35
    %v52 = vunpack.c.l.bf16 %v36
    %v53 = vunpack.c.l.bf16 %v37
    %v54 = vunpack.c.l.bf16 %v38
    %v55 = vunpack.c.l.bf16 %v39
    %v56 = vunpack.c.l.bf16 %v40
    %v57 = vunpack.c.l.bf16 %v41
    %v58 = vunpack.c.l.bf16 %v42
    %v59 = vunpack.c.l.bf16 %v43
    %v60 = vunpack.c.l.bf16 %v44
    %v61 = vunpack.c.l.bf16 %v45
    %v62 = vunpack.c.l.bf16 %v46
    %v63 = vunpack.c.l.bf16 %v47
    %v64 = vunpack.c.l.bf16 %v48
    %v65 = vadd.f32 %v49, %v50
    %v66 = vrot.slane %v65, 4
    %v67 = vadd.f32 %v65, %v66
    %v68 = vrot.slane %v67, 2
    %v69 = vadd.f32 %v67, %v68
    %v70 = vrot.slane %v69, 1
    %v71 = vadd.f32 %v69, %v70
    %v72 = vadd.f32 %v51, %v52
    %v73 = vrot.slane %v72, 4
    %v74 = vadd.f32 %v72, %v73
    %v75 = vrot.slane %v74, 2
    %v76 = vadd.f32 %v74, %v75
    %v77 = vrot.slane %v76, 1
    %v78 = vadd.f32 %v76, %v77
    %v79 = vadd.f32 %v53, %v54
    %v80 = vrot.slane %v79, 4
    %v81 = vadd.f32 %v79, %v80
    %v82 = vrot.slane %v81, 2
    %v83 = vadd.f32 %v81, %v82
    %v84 = vrot.slane %v83, 1
    %v85 = vadd.f32 %v83, %v84
    %v86 = vadd.f32 %v55, %v56
    %v87 = vrot.slane %v86, 4
    %v88 = vadd.f32 %v86, %v87
    %v89 = vrot.slane %v88, 2
    %v90 = vadd.f32 %v88, %v89
    %v91 = vrot.slane %v90, 1
    %v92 = vadd.f32 %v90, %v91
    %v93 = vadd.f32 %v57, %v58
    %v94 = vrot.slane %v93, 4
    %v95 = vadd.f32 %v93, %v94
    %v96 = vrot.slane %v95, 2
    %v97 = vadd.f32 %v95, %v96
    %v98 = vrot.slane %v97, 1
    %v99 = vadd.f32 %v97, %v98
    %v100 = vadd.f32 %v59, %v60
    %v101 = vrot.slane %v100, 4
    %v102 = vadd.f32 %v100, %v101
    %v103 = vrot.slane %v102, 2
    %v104 = vadd.f32 %v102, %v103
    %v105 = vrot.slane %v104, 1
    %v106 = vadd.f32 %v104, %v105
    %v107 = vadd.f32 %v61, %v62
    %v108 = vrot.slane %v107, 4
    %v109 = vadd.f32 %v107, %v108
    %v110 = vrot.slane %v109, 2
    %v111 = vadd.f32 %v109, %v110
    %v112 = vrot.slane %v111, 1
    %v113 = vadd.f32 %v111, %v112
    %v114 = vadd.f32 %v63, %v64
    %v115 = vrot.slane %v114, 4
    %v116 = vadd.f32 %v114, %v115
    %v117 = vrot.slane %v116, 2
    %v118 = vadd.f32 %v116, %v117
    %v119 = vrot.slane %v118, 1
    %v120 = vadd.f32 %v118, %v119
    %vm129 = vcmask 1041409
    %v130 = vsel %vm129, %v78, %v71
    %vm131 = vcmask 1042434
    %v132 = vsel %vm131, %v85, %v130
    %vm133 = vcmask 1043459
    %v134 = vsel %vm133, %v92, %v132
    %vm135 = vcmask 1044484
    %v136 = vsel %vm135, %v99, %v134
    %vm137 = vcmask 1045509
    %v138 = vsel %vm137, %v106, %v136
    %vm139 = vcmask 1046534
    %v140 = vsel %vm139, %v113, %v138
    %vm141 = vcmask 1047559
    %v142 = vsel %vm141, %v120, %v140
    %v144 = vadd.f32 %v32, %v142
    %145 = vst [vmem:[#allocation2] sm:$0xff] %v144
    // Predicated region
    $region34: #{tpu_custom_call.1} parent=1 // pred_check
      %p146 = pneg %p27
    $region35: #{tpu_custom_call.1} parent=1 // pred_check_branch
      %148 = sbr.rel (%p146) target = $region37
    $region36: #{tpu_custom_call.1} parent=1 // pred_region
      %v149 = vld [vmem:[#allocation2] sm:$0xff]
      %v150 = vmul.f32 %v149, 0.0625
      %v151 = vld [vmem:[%s1] sm:$0xff]
      %v152 = vld [vmem:[%s1 + $0x8] sm:$0xff]
      %v153 = vld [vmem:[%s1 + $0x10] sm:$0xff]
      %v154 = vld [vmem:[%s1 + $0x18] sm:$0xff]
      %v155 = vld [vmem:[%s1 + $0x20] sm:$0xff]
      %v156 = vld [vmem:[%s1 + $0x28] sm:$0xff]
      %v157 = vld [vmem:[%s1 + $0x30] sm:$0xff]
      %v158 = vld [vmem:[%s1 + $0x38] sm:$0xff]
      %v159 = vld [vmem:[%s1 + $0x40] sm:$0xff]
      %v160 = vld [vmem:[%s1 + $0x48] sm:$0xff]
      %v161 = vld [vmem:[%s1 + $0x50] sm:$0xff]
      %v162 = vld [vmem:[%s1 + $0x58] sm:$0xff]
      %v163 = vld [vmem:[%s1 + $0x60] sm:$0xff]
      %v164 = vld [vmem:[%s1 + $0x68] sm:$0xff]
      %v165 = vld [vmem:[%s1 + $0x70] sm:$0xff]
      %v166 = vld [vmem:[%s1 + $0x78] sm:$0xff]
      %v167 = vld [vmem:[%s2] sm:$0x1]
      %v169 = vperm.slane %v167, 0
      %171 = vmatpush.msra.mxu0 %v166
      %172 = vmatpush.msra.mxu0 %v165
      %173 = vmatpush.msra.mxu0 %v164
      %174 = vmatpush.msra.mxu0 %v163
      %175 = vmatpush.msra.mxu0 %v162
      %176 = vmatpush.msra.mxu0 %v161
      %177 = vmatpush.msra.mxu0 %v160
      %178 = vmatpush.msra.mxu0 %v159
      %179 = vmatpush.msra.mxu0 %v158
      %180 = vmatpush.msra.mxu0 %v157
      %181 = vmatpush.msra.mxu0 %v156
      %182 = vmatpush.msra.mxu0 %v155
      %183 = vmatpush.msra.mxu0 %v154
      %184 = vmatpush.msra.mxu0 %v153
      %185 = vmatpush.msra.mxu0 %v152
      %186 = vmatpush.msra.mxu0 %v151
      %187 = vmatmul.f32.gmra.mxu0 %v150
      %v188 = vpop.f32.mrf.mxu0
      %v189 = vadd.f32 %v169, %v188
      %190 = vdwg.mxu0
      %v191 = vmax.f32 %v189, 0.0
      %v192 = vld [vmem:[%s3] sm:$0xff]
      %v193 = vld [vmem:[%s3 + $0x8] sm:$0xff]
      %v194 = vld [vmem:[%s3 + $0x10] sm:$0xff]
      %v195 = vld [vmem:[%s3 + $0x18] sm:$0xff]
      %v196 = vld [vmem:[%s3 + $0x20] sm:$0xff]
      %v197 = vld [vmem:[%s3 + $0x28] sm:$0xff]
      %v198 = vld [vmem:[%s3 + $0x30] sm:$0xff]
      %v199 = vld [vmem:[%s3 + $0x38] sm:$0xff]
      %v200 = vld [vmem:[%s4] sm:$0x1]
      %v202 = vperm.slane %v200, 0
      %vm204 = vcmask 523264
      %v206 = vsel %vm204, %v191, 0
      %208 = vmatpush.msra.mxu0 0.0
      %209 = vmatpush.msra.mxu0 0.0
      %210 = vmatpush.msra.mxu0 0.0
      %211 = vmatpush.msra.mxu0 0.0
      %212 = vmatpush.msra.mxu0 0.0
      %213 = vmatpush.msra.mxu0 0.0
      %214 = vmatpush.msra.mxu0 0.0
      %215 = vmatpush.msra.mxu0 0.0
      %216 = vmatpush.msra.mxu0 %v199
      %217 = vmatpush.msra.mxu0 %v198
      %218 = vmatpush.msra.mxu0 %v197
      %219 = vmatpush.msra.mxu0 %v196
      %220 = vmatpush.msra.mxu0 %v195
      %221 = vmatpush.msra.mxu0 %v194
      %222 = vmatpush.msra.mxu0 %v193
      %223 = vmatpush.msra.mxu0 %v192
      %224 = vmatmul.f32.gmra.mxu0 %v206
      %v225 = vpop.f32.mrf.mxu0
      %v226 = vadd.f32 %v202, %v225
      %227 = vdwg.mxu0
      %v228 = vmax.f32 %v226, 0.0
      %v229 = vld [vmem:[%s5] sm:$0xff]
      %v230 = vld [vmem:[%s5 + $0x8] sm:$0xff]
      %v231 = vld [vmem:[%s5 + $0x10] sm:$0xff]
      %v232 = vld [vmem:[%s5 + $0x18] sm:$0xff]
      %v233 = vld [vmem:[%s6] sm:$0x1]
      %v235 = vperm.slane %v233, 0
      %vm237 = vcmask 261120
      %v239 = vsel %vm237, %v228, 0
      %241 = vmatpush.msra.mxu0 0.0
      %242 = vmatpush.msra.mxu0 0.0
      %243 = vmatpush.msra.mxu0 0.0
      %244 = vmatpush.msra.mxu0 0.0
      %245 = vmatpush.msra.mxu0 0.0
      %246 = vmatpush.msra.mxu0 0.0
      %247 = vmatpush.msra.mxu0 0.0
      %248 = vmatpush.msra.mxu0 0.0
      %249 = vmatpush.msra.mxu0 0.0
      %250 = vmatpush.msra.mxu0 0.0
      %251 = vmatpush.msra.mxu0 0.0
      %252 = vmatpush.msra.mxu0 0.0
      %253 = vmatpush.msra.mxu0 %v232
      %254 = vmatpush.msra.mxu0 %v231
      %255 = vmatpush.msra.mxu0 %v230
      %256 = vmatpush.msra.mxu0 %v229
      %257 = vmatmul.f32.gmra.mxu0 %v239
      %v258 = vpop.f32.mrf.mxu0
      %v259 = vadd.f32 %v235, %v258
      %260 = vdwg.mxu0
      %vm261 = vcmask 64512
      %262 = vst.msk [vmem:[#allocation3] sm:$0xff] %vm261, %v259
    $region37: #{tpu_custom_call.1} parent=1 // pred_fallthru
      _
    // Predicated region
    $region38: #{tpu_custom_call.1} parent=1 // pred_check
      _
    $region39: #{tpu_custom_call.1} parent=1 // pred_check_branch
      %264 = sbr.rel (0) target = $region41
    $region40: #{tpu_custom_call.1} parent=1 // pred_region
      %266 = vsyncadd [#allocation4], 0
      %s268 = sshll.u32 [#allocation3], 4
      %s269 = int_to_ptr.vmem [resolvable:$true] %s268
      %s270 = sshll.u32 %s7, 4
      %s271 = int_to_ptr.hbm [resolvable:$true] %s270
      %273 = dma.vmem_to_hbm [thread:$0]  %s269, 128, %s271, [#allocation4]
    $region41: #{tpu_custom_call.1} parent=1 // pred_fallthru
      _
    // Predicated region
    $region42: #{tpu_custom_call.1} parent=1 // pred_check
      _
    $region43: #{tpu_custom_call.1} parent=1 // pred_check_branch
      %275 = sbr.rel (0) target = $region45
    $region44: #{tpu_custom_call.1} parent=1 // pred_region
      %277 = dma.done [#allocation4], 128
    $region45: #{tpu_custom_call.1} parent=1 // pred_fallthru
      _
    %278 = vsyncpa [#allocation4], 1

</llo_original>
